<compile_context>
chip_gen: v7x
topology: tpu7x:2x2x1
jax: 0.10.0
libtpu: 0.0.40
codegen_flags: <defaults>
</compile_context>

<pallas_src>
import functools

import jax
import jax.numpy as jnp
from jax.experimental import pallas as pl
from jax.experimental.pallas import tpu as pltpu


def _globalization_kernel(x_ref, a1_ref, p1_ref, b1_ref, a2_ref, b2_ref, out_ref):
    # x_ref  : (1, H, W*C)    input, W folded into the lane axis (no channel padding)
    # a1_ref : (W*C, W*2C)    kron(I_W, W1a)  -- conv1 weights acting on the x half of the concat
    # p1_ref : (W*C, W*2C)    (R @ W1b @ T) / (H*W) -- conv1 weights acting on the pooled half
    # b1_ref : (1, W*2C)      conv1 bias tiled across W
    # a2_ref : (W*2C, W*2C)   kron(I_W, W2_padded)
    # b2_ref : (1, W*2C)      conv2 bias (out-channels padded) tiled across W
    # out_ref: (1, H, W*2C)   lane-dense output (padded out-channels sliced away in wrapper)
    x = x_ref[0]                                           # (H, W*C) f32

    # AdaptiveAvgPool2d((1,1)): the pooled branch only adds a per-batch constant to conv1,
    # so the channel concat is never materialized.  Sum over H is a sublane (XLU) reduce;
    # the sum over W and the 1/(H*W) scaling live inside p1.
    p_row = jnp.sum(x, axis=0, keepdims=True)              # (1, W*C)
    g = jnp.dot(p_row, p1_ref[...], preferred_element_type=jnp.float32)   # (1, W*2C)

    h1 = jnp.dot(x, a1_ref[...], preferred_element_type=jnp.float32)      # (H, W*2C)
    y1 = jnp.maximum(h1 + (g + b1_ref[...]), 0.0)          # conv1 + ReLU (pool+bias broadcast)

    h2 = jnp.dot(y1, a2_ref[...], preferred_element_type=jnp.float32)     # (H, W*2C)
    y2 = jnp.maximum(h2 + b2_ref[...], 0.0)                # conv2 + ReLU

    out_ref[0] = y2                                        # unmasked 128-lane store


@functools.partial(jax.jit, static_argnames=())
def globalization_forward(x_nchw, w1, b1, w2, b2):
    """x_nchw: (N, C, H, W) f32.
    w1: (2C, 2C) [out, in] 1x1-conv weight, b1: (2C,), w2: (C, 2C), b2: (C,).
    Returns (N, C, H, W)."""
    N, C, H, W = x_nchw.shape
    C2 = 2 * C
    Lin = W * C            # folded input lane width  (64 for these shapes)
    Lout = W * C2          # folded hidden/output lane width (128 for these shapes)
    f32 = jnp.float32

    # ---- fold the 1x1 convs + pooling into lane-folded matmul weights (tiny, fused under jit) ----
    w1m = jnp.transpose(w1)                 # (2C_in, 2C_out)
    w1a = w1m[:C, :]                        # part acting on x
    w1b = w1m[C:, :]                        # part acting on pooled(x)
    eye_w = jnp.eye(W, dtype=f32)
    a1 = jnp.kron(eye_w, w1a)                                               # (W*C, W*2C)
    r = jnp.kron(jnp.ones((W, 1), f32), jnp.eye(C, dtype=f32))              # (W*C, C)
    t = jnp.kron(jnp.ones((1, W), f32), jnp.eye(C2, dtype=f32))             # (2C, W*2C)
    p1 = (r @ w1b @ t) / float(H * W)                                       # (W*C, W*2C)
    bias1 = (b1 @ t)[None, :]                                               # (1, W*2C)

    w2m = jnp.transpose(w2)                                                 # (2C, C)
    w2p = jnp.pad(w2m, ((0, 0), (0, C2 - C)))                               # pad out-ch C -> 2C
    a2 = jnp.kron(eye_w, w2p)                                               # (W*2C, W*2C)
    bias2 = (jnp.pad(b2, (0, C2 - C)) @ t)[None, :]                         # (1, W*2C)

    # ---- lane-dense input: NCHW -> NHWC -> (N, H, W*C)  (contiguous, free reshape) ----
    x_f = jnp.transpose(x_nchw, (0, 2, 3, 1)).reshape(N, H, Lin)

    flops = int(N * 2 * (H * Lin * Lout + Lin * Lout + H * Lout * Lout))
    bytes_accessed = int(4 * (x_f.size + a1.size + p1.size + a2.size + 2 * Lout
                              + N * H * Lout))

    out_f = pl.pallas_call(
        _globalization_kernel,
        out_shape=jax.ShapeDtypeStruct((N, H, Lout), jnp.float32),
        grid_spec=pltpu.PrefetchScalarGridSpec(
            num_scalar_prefetch=0,
            grid=(N,),
            in_specs=[
                pl.BlockSpec((1, H, Lin), lambda n: (n, 0, 0)),
                pl.BlockSpec((Lin, Lout), lambda n: (0, 0)),
                pl.BlockSpec((Lin, Lout), lambda n: (0, 0)),
                pl.BlockSpec((1, Lout), lambda n: (0, 0)),
                pl.BlockSpec((Lout, Lout), lambda n: (0, 0)),
                pl.BlockSpec((1, Lout), lambda n: (0, 0)),
            ],
            out_specs=pl.BlockSpec((1, H, Lout), lambda n: (n, 0, 0)),
        ),
        compiler_params=pltpu.CompilerParams(dimension_semantics=("parallel",)),
        cost_estimate=pl.CostEstimate(flops=flops, transcendentals=0,
                                      bytes_accessed=bytes_accessed),
    )(x_f, a1, p1, bias1, a2, bias2)

    # un-fold lanes: (N, H, W*2C) -> (N, H, W, 2C) -> drop padded out-channels -> NCHW
    out = out_f.reshape(N, H, W, C2)[..., :C]
    return jnp.transpose(out, (0, 3, 1, 2))


def ref_forward(x, w1, b1, w2, b2):
    """Pure-JAX reference of the PyTorch module."""
    p = jnp.mean(x, axis=(2, 3), keepdims=True)                       # AdaptiveAvgPool2d((1,1))
    xc = jnp.concatenate([x, jnp.broadcast_to(p, x.shape)], axis=1)   # cat along channels
    y = jnp.einsum("nihw,oi->nohw", xc, w1) + b1[None, :, None, None]
    y = jnp.maximum(y, 0.0)
    y = jnp.einsum("nihw,oi->nohw", y, w2) + b2[None, :, None, None]
    return jnp.maximum(y, 0.0)


if __name__ == "__main__":
    key = jax.random.PRNGKey(0)
    kx, k1, k2, k3, k4 = jax.random.split(key, 5)

    N, C, H, W = 2, 4, 16, 16
    x = jax.random.normal(kx, (N, C, H, W), jnp.float32)
    w1 = 0.2 * jax.random.normal(k1, (2 * C, 2 * C), jnp.float32)   # conv1: 2C -> 2C, 1x1
    b1 = 0.1 * jax.random.normal(k2, (2 * C,), jnp.float32)
    w2 = 0.2 * jax.random.normal(k3, (C, 2 * C), jnp.float32)       # conv2: 2C -> C, 1x1
    b2 = 0.1 * jax.random.normal(k4, (C,), jnp.float32)

    out = globalization_forward(x, w1, b1, w2, b2)
    out = jax.block_until_ready(out)

    ref = ref_forward(x, w1, b1, w2, b2)
    assert out.shape == (N, C, H, W)
    assert jnp.allclose(out, ref, atol=1e-4, rtol=1e-4), "mismatch vs JAX reference"

    print("KERNEL_OK")
</pallas_src>

<mosaic_0001>
module attributes {stable_mosaic.version = 11 : i64} {
  func.func @_globalization_kernel(%arg0: i32, %arg1: memref<1x16x64xf32, #tpu.memory_space<vmem>>, %arg2: memref<64x128xf32, #tpu.memory_space<vmem>>, %arg3: memref<64x128xf32, #tpu.memory_space<vmem>>, %arg4: memref<1x128xf32, #tpu.memory_space<vmem>>, %arg5: memref<128x128xf32, #tpu.memory_space<vmem>>, %arg6: memref<1x128xf32, #tpu.memory_space<vmem>>, %arg7: memref<1x16x128xf32, #tpu.memory_space<vmem>>) attributes {dimension_semantics = [#tpu.dimension_semantics<parallel>], iteration_bounds = array<i64: 2>, scalar_prefetch = 0 : i64, scratch_operands = 0 : i64, tpu.core_type = #tpu.core_type<tc>, window_params = [{transform_indices = @transform_0, window_bounds = array<i64: 1, 16, 64>}, {pipeline_mode = #tpu.pipeline_mode<synchronous>, transform_indices = @transform_1, window_bounds = array<i64: 64, 128>}, {pipeline_mode = #tpu.pipeline_mode<synchronous>, transform_indices = @transform_2, window_bounds = array<i64: 64, 128>}, {pipeline_mode = #tpu.pipeline_mode<synchronous>, transform_indices = @transform_3, window_bounds = array<i64: 1, 128>}, {pipeline_mode = #tpu.pipeline_mode<synchronous>, transform_indices = @transform_4, window_bounds = array<i64: 128, 128>}, {pipeline_mode = #tpu.pipeline_mode<synchronous>, transform_indices = @transform_5, window_bounds = array<i64: 1, 128>}, {transform_indices = @transform_6, window_bounds = array<i64: 1, 16, 128>}]} {
    %c0 = arith.constant 0 : index
    %c0_0 = arith.constant 0 : index
    %c0_1 = arith.constant 0 : index
    %0 = vector.load %arg1[%c0, %c0_0, %c0_1] : memref<1x16x64xf32, #tpu.memory_space<vmem>>, vector<1x16x64xf32>
    %1 = vector.shape_cast %0 : vector<1x16x64xf32> to vector<16x64xf32>
    %cst = arith.constant dense<0.000000e+00> : vector<64xf32>
    %2 = vector.multi_reduction <add>, %1, %cst [0] : vector<16x64xf32> to vector<64xf32>
    %3 = vector.shape_cast %2 : vector<64xf32> to vector<1x64xf32>
    %c0_2 = arith.constant 0 : index
    %c0_3 = arith.constant 0 : index
    %4 = vector.load %arg3[%c0_2, %c0_3] : memref<64x128xf32, #tpu.memory_space<vmem>>, vector<64x128xf32>
    %cst_4 = arith.constant dense<0.000000e+00> : vector<1x128xf32>
    %5 = tpu.matmul %3, %4, %cst_4 {dimension_numbers = #tpu.dot_dimension_numbers<[1], [0], [0], [1], [0, 0, 1, 1], [], []>} : vector<1x64xf32>, vector<64x128xf32>, vector<1x128xf32> -> vector<1x128xf32>
    %c0_5 = arith.constant 0 : index
    %c0_6 = arith.constant 0 : index
    %6 = vector.load %arg2[%c0_5, %c0_6] : memref<64x128xf32, #tpu.memory_space<vmem>>, vector<64x128xf32>
    %cst_7 = arith.constant dense<0.000000e+00> : vector<16x128xf32>
    %7 = tpu.matmul %1, %6, %cst_7 {dimension_numbers = #tpu.dot_dimension_numbers<[1], [0], [0], [1], [0, 0, 1, 1], [], []>} : vector<16x64xf32>, vector<64x128xf32>, vector<16x128xf32> -> vector<16x128xf32>
    %c0_8 = arith.constant 0 : index
    %c0_9 = arith.constant 0 : index
    %8 = vector.load %arg4[%c0_8, %c0_9] : memref<1x128xf32, #tpu.memory_space<vmem>>, vector<1x128xf32>
    %9 = arith.addf %5, %8 : vector<1x128xf32>
    %10 = vector.broadcast %9 : vector<1x128xf32> to vector<16x128xf32>
    %11 = arith.addf %7, %10 : vector<16x128xf32>
    %cst_10 = arith.constant 0.000000e+00 : f32
    %12 = vector.broadcast %cst_10 : f32 to vector<16x128xf32>
    %13 = arith.maximumf %11, %12 : vector<16x128xf32>
    %c0_11 = arith.constant 0 : index
    %c0_12 = arith.constant 0 : index
    %14 = vector.load %arg5[%c0_11, %c0_12] : memref<128x128xf32, #tpu.memory_space<vmem>>, vector<128x128xf32>
    %cst_13 = arith.constant dense<0.000000e+00> : vector<16x128xf32>
    %15 = tpu.matmul %13, %14, %cst_13 {dimension_numbers = #tpu.dot_dimension_numbers<[1], [0], [0], [1], [0, 0, 1, 1], [], []>} : vector<16x128xf32>, vector<128x128xf32>, vector<16x128xf32> -> vector<16x128xf32>
    %c0_14 = arith.constant 0 : index
    %c0_15 = arith.constant 0 : index
    %16 = vector.load %arg6[%c0_14, %c0_15] : memref<1x128xf32, #tpu.memory_space<vmem>>, vector<1x128xf32>
    %17 = vector.broadcast %16 : vector<1x128xf32> to vector<16x128xf32>
    %18 = arith.addf %15, %17 : vector<16x128xf32>
    %cst_16 = arith.constant 0.000000e+00 : f32
    %19 = vector.broadcast %cst_16 : f32 to vector<16x128xf32>
    %20 = arith.maximumf %18, %19 : vector<16x128xf32>
    %c0_17 = arith.constant 0 : index
    %c0_18 = arith.constant 0 : index
    %c0_19 = arith.constant 0 : index
    %21 = vector.load %arg7[%c0_17, %c0_18, %c0_19] : memref<1x16x128xf32, #tpu.memory_space<vmem>>, vector<1x16x128xf32>
    %22 = vector.shape_cast %21 : vector<1x16x128xf32> to vector<16x128xf32>
    %23 = vector.shape_cast %20 : vector<16x128xf32> to vector<1x16x128xf32>
    tpu.vector_store %arg7[%c0_17, %c0_18, %c0_19], %23 {strides = array<i32>} : memref<1x16x128xf32, #tpu.memory_space<vmem>>, vector<1x16x128xf32>,
    return
  }
  func.func @transform_0(%arg0: i32) -> (i32, i32, i32) {
    %c0_i32 = arith.constant 0 : i32
    %c0_i32_0 = arith.constant 0 : i32
    %c0_i32_1 = arith.constant 0 : i32
    return %arg0, %c0_i32, %c0_i32_0 : i32, i32, i32
  }
  func.func @transform_1(%arg0: i32) -> (i32, i32) {
    %c0_i32 = arith.constant 0 : i32
    %c0_i32_0 = arith.constant 0 : i32
    %c0_i32_1 = arith.constant 0 : i32
    return %c0_i32, %c0_i32_0 : i32, i32
  }
  func.func @transform_2(%arg0: i32) -> (i32, i32) {
    %c0_i32 = arith.constant 0 : i32
    %c0_i32_0 = arith.constant 0 : i32
    %c0_i32_1 = arith.constant 0 : i32
    return %c0_i32, %c0_i32_0 : i32, i32
  }
  func.func @transform_3(%arg0: i32) -> (i32, i32) {
    %c0_i32 = arith.constant 0 : i32
    %c0_i32_0 = arith.constant 0 : i32
    %c0_i32_1 = arith.constant 0 : i32
    return %c0_i32, %c0_i32_0 : i32, i32
  }
  func.func @transform_4(%arg0: i32) -> (i32, i32) {
    %c0_i32 = arith.constant 0 : i32
    %c0_i32_0 = arith.constant 0 : i32
    %c0_i32_1 = arith.constant 0 : i32
    return %c0_i32, %c0_i32_0 : i32, i32
  }
  func.func @transform_5(%arg0: i32) -> (i32, i32) {
    %c0_i32 = arith.constant 0 : i32
    %c0_i32_0 = arith.constant 0 : i32
    %c0_i32_1 = arith.constant 0 : i32
    return %c0_i32, %c0_i32_0 : i32, i32
  }
  func.func @transform_6(%arg0: i32) -> (i32, i32, i32) {
    %c0_i32 = arith.constant 0 : i32
    %c0_i32_0 = arith.constant 0 : i32
    %c0_i32_1 = arith.constant 0 : i32
    return %arg0, %c0_i32, %c0_i32_0 : i32, i32, i32
  }
}

</mosaic_0001>

<llo_original>
// kernel: globalization_forward.1
$region0: #{globalization_forward.1}
  #allocation0 [shape = 'u32[]', space=smem, size = 0x4, offset = 0x4, fixed_abs, tag = 'smem constant byte address 0x4 - core index']
  #allocation1 [shape = 'u32[144,128]{1,0:T(1,128)}', space=vmem, size = 0x12000, scoped, tag = 'internal scratch']
  %s0 = inlined_call_operand.vmem [shape: f32[2,16,64], index: 0, kind: input, shape index: {}]
  %s1 = inlined_call_operand.vmem [shape: f32[64,128], index: 1, kind: input, shape index: {}]
  %s2 = inlined_call_operand.vmem [shape: f32[64,128], index: 2, kind: input, shape index: {}]
  %s3 = inlined_call_operand.vmem [shape: f32[1,128], index: 3, kind: input, shape index: {}]
  %s4 = inlined_call_operand.vmem [shape: f32[128,128], index: 4, kind: input, shape index: {}]
  %s5 = inlined_call_operand.vmem [shape: f32[1,128], index: 5, kind: input, shape index: {}]
  %s6 = inlined_call_operand.vmem [shape: f32[2,16,128], index: 6, kind: output, shape index: {}]
  %s7 = sld [smem:[#allocation0]]
  $region57: #{globalization_forward.1} parent=0
    _
  %s9 = ssub.s32 1, %s7
  %s10 = scalar_select 0, %s9, %s7
  loop: start=0, step=1, limit=4
  $region2: #{globalization_forward.1} parent=0 // loop_pre_header
    _
  $region3: #{globalization_forward.1} parent=0 // loop_header
    %s12 = sphi 0, %s16
    %p13 = scmp.ge.s32.totalorder %s12, 4
    %s22 = sphi 0, %s24
    %s25 = sphi 0, %s22
    %s26 = sphi 0, %s25
    %s42 = sphi 0, %s26
    %s46 = sphi 0, %s46
    %s48 = sphi 0, %s46
    %s49 = sphi 0, %s48
    %s63 = sphi 0, %s49
    %s67 = sphi 0, %s67
    %s69 = sphi 0, %s67
    %s70 = sphi 0, %s69
    %s84 = sphi 0, %s70
    %s88 = sphi 0, %s88
    %s90 = sphi 0, %s88
    %s91 = sphi 0, %s90
    %s105 = sphi 0, %s91
    %s109 = sphi 0, %s109
    %s111 = sphi 0, %s109
    %s112 = sphi 0, %s111
    %s126 = sphi 0, %s112
    %s130 = sphi 0, %s130
    %s132 = sphi 0, %s130
    %s133 = sphi 0, %s132
    %s147 = sphi 0, %s133
    %s153 = sphi 0, %s155
    %s156 = sphi 0, %s153
    %s157 = sphi 0, %s156
    %s173 = sphi 0, %s157
  $region4: #{globalization_forward.1} parent=0 // loop_header_branch
    %15 = sbr.rel (%p13) target = $region8
  $region5: #{globalization_forward.1} parent=0 // loop_body
    %s17 = ssub.s32 %s12, 1
    %s18 = ssub.s32 %s12, 2
    %s19 = sadd.s32 %s12, 1
    %s20 = ssub.s32 %s12, %s19
    %p21 = scmp.eq.s32.totalorder %s20, 0
    %s23 = sadd.s32 %s22, 1
    %s24 = scalar_select %p21, %s22, %s23
    %p27 = pneg %p21
    %p28 = scmp.eq.s32.totalorder %s12, 1
    %p29 = por %p27, %p28
    %p30 = scmp.ne.s32.totalorder %s22, %s25
    %p31 = scmp.eq.s32.totalorder %s12, 0
    %p32 = por %p30, %p31
    %p33 = scmp.ne.s32.totalorder %s22, %s25
    %p34 = scmp.eq.s32.totalorder %s17, 1
    %p35 = por %p33, %p34
    %p36 = scmp.ne.s32.totalorder %s25, %s26
    %p37 = scmp.eq.s32.totalorder %s17, 0
    %p38 = por %p36, %p37
    %p39 = scmp.ne.s32.totalorder %s25, %s26
    %p40 = scmp.eq.s32.totalorder %s18, 1
    %p41 = por %p39, %p40
    %p43 = scmp.ne.s32.totalorder %s26, %s42
    %p44 = scmp.eq.s32.totalorder %s18, 0
    %p45 = por %p43, %p44
    %s47 = sadd.s32 %s46, 1
    %p50 = scmp.eq.s32.totalorder %s12, 1
    %p51 = scmp.ne.s32.totalorder %s46, %s48
    %p52 = scmp.eq.s32.totalorder %s12, 0
    %p53 = por %p51, %p52
    %p54 = scmp.ne.s32.totalorder %s46, %s48
    %p55 = scmp.eq.s32.totalorder %s17, 1
    %p56 = por %p54, %p55
    %p57 = scmp.ne.s32.totalorder %s48, %s49
    %p58 = scmp.eq.s32.totalorder %s17, 0
    %p59 = por %p57, %p58
    %p60 = scmp.ne.s32.totalorder %s48, %s49
    %p61 = scmp.eq.s32.totalorder %s18, 1
    %p62 = por %p60, %p61
    %p64 = scmp.ne.s32.totalorder %s49, %s63
    %p65 = scmp.eq.s32.totalorder %s18, 0
    %p66 = por %p64, %p65
    %s68 = sadd.s32 %s67, 1
    %p71 = scmp.eq.s32.totalorder %s12, 1
    %p72 = scmp.ne.s32.totalorder %s67, %s69
    %p73 = scmp.eq.s32.totalorder %s12, 0
    %p74 = por %p72, %p73
    %p75 = scmp.ne.s32.totalorder %s67, %s69
    %p76 = scmp.eq.s32.totalorder %s17, 1
    %p77 = por %p75, %p76
    %p78 = scmp.ne.s32.totalorder %s69, %s70
    %p79 = scmp.eq.s32.totalorder %s17, 0
    %p80 = por %p78, %p79
    %p81 = scmp.ne.s32.totalorder %s69, %s70
    %p82 = scmp.eq.s32.totalorder %s18, 1
    %p83 = por %p81, %p82
    %p85 = scmp.ne.s32.totalorder %s70, %s84
    %p86 = scmp.eq.s32.totalorder %s18, 0
    %p87 = por %p85, %p86
    %s89 = sadd.s32 %s88, 1
    %p92 = scmp.eq.s32.totalorder %s12, 1
    %p93 = scmp.ne.s32.totalorder %s88, %s90
    %p94 = scmp.eq.s32.totalorder %s12, 0
    %p95 = por %p93, %p94
    %p96 = scmp.ne.s32.totalorder %s88, %s90
    %p97 = scmp.eq.s32.totalorder %s17, 1
    %p98 = por %p96, %p97
    %p99 = scmp.ne.s32.totalorder %s90, %s91
    %p100 = scmp.eq.s32.totalorder %s17, 0
    %p101 = por %p99, %p100
    %p102 = scmp.ne.s32.totalorder %s90, %s91
    %p103 = scmp.eq.s32.totalorder %s18, 1
    %p104 = por %p102, %p103
    %p106 = scmp.ne.s32.totalorder %s91, %s105
    %p107 = scmp.eq.s32.totalorder %s18, 0
    %p108 = por %p106, %p107
    %s110 = sadd.s32 %s109, 1
    %p113 = scmp.eq.s32.totalorder %s12, 1
    %p114 = scmp.ne.s32.totalorder %s109, %s111
    %p115 = scmp.eq.s32.totalorder %s12, 0
    %p116 = por %p114, %p115
    %p117 = scmp.ne.s32.totalorder %s109, %s111
    %p118 = scmp.eq.s32.totalorder %s17, 1
    %p119 = por %p117, %p118
    %p120 = scmp.ne.s32.totalorder %s111, %s112
    %p121 = scmp.eq.s32.totalorder %s17, 0
    %p122 = por %p120, %p121
    %p123 = scmp.ne.s32.totalorder %s111, %s112
    %p124 = scmp.eq.s32.totalorder %s18, 1
    %p125 = por %p123, %p124
    %p127 = scmp.ne.s32.totalorder %s112, %s126
    %p128 = scmp.eq.s32.totalorder %s18, 0
    %p129 = por %p127, %p128
    %s131 = sadd.s32 %s130, 1
    %p134 = scmp.eq.s32.totalorder %s12, 1
    %p135 = scmp.ne.s32.totalorder %s130, %s132
    %p136 = scmp.eq.s32.totalorder %s12, 0
    %p137 = por %p135, %p136
    %p138 = scmp.ne.s32.totalorder %s130, %s132
    %p139 = scmp.eq.s32.totalorder %s17, 1
    %p140 = por %p138, %p139
    %p141 = scmp.ne.s32.totalorder %s132, %s133
    %p142 = scmp.eq.s32.totalorder %s17, 0
    %p143 = por %p141, %p142
    %p144 = scmp.ne.s32.totalorder %s132, %s133
    %p145 = scmp.eq.s32.totalorder %s18, 1
    %p146 = por %p144, %p145
    %p148 = scmp.ne.s32.totalorder %s133, %s147
    %p149 = scmp.eq.s32.totalorder %s18, 0
    %p150 = por %p148, %p149
    %s151 = ssub.s32 %s12, %s19
    %p152 = scmp.eq.s32.totalorder %s151, 0
    %s154 = sadd.s32 %s153, 1
    %s155 = scalar_select %p152, %s153, %s154
    %p158 = pneg %p152
    %p159 = scmp.eq.s32.totalorder %s12, 1
    %p160 = por %p158, %p159
    %p161 = scmp.ne.s32.totalorder %s153, %s156
    %p162 = scmp.eq.s32.totalorder %s12, 0
    %p163 = por %p161, %p162
    %p164 = scmp.ne.s32.totalorder %s153, %s156
    %p165 = scmp.eq.s32.totalorder %s17, 1
    %p166 = por %p164, %p165
    %p167 = scmp.ne.s32.totalorder %s156, %s157
    %p168 = scmp.eq.s32.totalorder %s17, 0
    %p169 = por %p167, %p168
    %p170 = scmp.ne.s32.totalorder %s156, %s157
    %p171 = scmp.eq.s32.totalorder %s18, 1
    %p172 = por %p170, %p171
    %p174 = scmp.ne.s32.totalorder %s157, %s173
    %p175 = scmp.eq.s32.totalorder %s18, 0
    %p176 = por %p174, %p175
    %p177 = scmp.le.s32.totalorder 1, %s12
    %p178 = scmp.lt.s32.totalorder %s12, 3
    %p179 = pnand %p177, %p178
    %p180 = pneg %p179
    // Predicated region
    $region9: #{globalization_forward.1} parent=5 // pred_check
      _
    $region10: #{globalization_forward.1} parent=5 // pred_check_branch
      %182 = sbr.rel (%p179) target = $region12
    $region11: #{globalization_forward.1} parent=5 // pred_region
      %s183 = ssub.s32 %s12, 1
      // Predicated region
      $region13: #{globalization_forward.1} parent=11 // pred_check
        %p184 = pneg %p59
      $region14: #{globalization_forward.1} parent=11 // pred_check_branch
        %186 = sbr.rel (%p184) target = $region16
      $region15: #{globalization_forward.1} parent=11 // pred_region
        _
      $region16: #{globalization_forward.1} parent=11 // pred_fallthru
        _
      // Predicated region
      $region17: #{globalization_forward.1} parent=11 // pred_check
        %p187 = pneg %p80
      $region18: #{globalization_forward.1} parent=11 // pred_check_branch
        %189 = sbr.rel (%p187) target = $region20
      $region19: #{globalization_forward.1} parent=11 // pred_region
        _
      $region20: #{globalization_forward.1} parent=11 // pred_fallthru
        _
      // Predicated region
      $region21: #{globalization_forward.1} parent=11 // pred_check
        %p190 = pneg %p101
      $region22: #{globalization_forward.1} parent=11 // pred_check_branch
        %192 = sbr.rel (%p190) target = $region24
      $region23: #{globalization_forward.1} parent=11 // pred_region
        _
      $region24: #{globalization_forward.1} parent=11 // pred_fallthru
        _
      // Predicated region
      $region25: #{globalization_forward.1} parent=11 // pred_check
        %p193 = pneg %p122
      $region26: #{globalization_forward.1} parent=11 // pred_check_branch
        %195 = sbr.rel (%p193) target = $region28
      $region27: #{globalization_forward.1} parent=11 // pred_region
        _
      $region28: #{globalization_forward.1} parent=11 // pred_fallthru
        _
      // Predicated region
      $region29: #{globalization_forward.1} parent=11 // pred_check
        %p196 = pneg %p143
      $region30: #{globalization_forward.1} parent=11 // pred_check_branch
        %198 = sbr.rel (%p196) target = $region32
      $region31: #{globalization_forward.1} parent=11 // pred_region
        _
      $region32: #{globalization_forward.1} parent=11 // pred_fallthru
        _
    $region12: #{globalization_forward.1} parent=5 // pred_fallthru
      _
    %p199 = scmp.lt.s32.totalorder %s12, 2
    // Predicated region
    $region33: #{globalization_forward.1} parent=5 // pred_check
      %p200 = pneg %p199
    $region34: #{globalization_forward.1} parent=5 // pred_check_branch
      %202 = sbr.rel (%p200) target = $region36
    $region35: #{globalization_forward.1} parent=5 // pred_region
      // Predicated region
      $region37: #{globalization_forward.1} parent=35 // pred_check
        %p203 = pneg %p32
      $region38: #{globalization_forward.1} parent=35 // pred_check_branch
        %205 = sbr.rel (%p203) target = $region40
      $region39: #{globalization_forward.1} parent=35 // pred_region
        %p206 = scmp.lt.s32.totalorder %s12, 1
        %s207 = scalar_select %p206, %s12, 1
        %s208 = smul.addr %s207, 2
        %s209 = smul.addr %s208, 8
        %s210 = scalar_lea.vmem %s0, %s209
      $region40: #{globalization_forward.1} parent=35 // pred_fallthru
        _
    $region36: #{globalization_forward.1} parent=5 // pred_fallthru
      _
    %p211 = scmp.le.s32.totalorder 1, %s12
    %p212 = scmp.lt.s32.totalorder %s12, 3
    %p213 = pnand %p211, %p212
    %p214 = pneg %p213
    // Predicated region
    $region41: #{globalization_forward.1} parent=5 // pred_check
      _
    $region42: #{globalization_forward.1} parent=5 // pred_check_branch
      %216 = sbr.rel (%p213) target = $region44
    $region43: #{globalization_forward.1} parent=5 // pred_region
      %s217 = ssub.s32 %s12, 1
      %p218 = scmp.lt.s32.totalorder %s17, 1
      %s219 = scalar_select %p218, %s17, 1
      %s220 = smul.addr %s219, 2
      %s221 = smul.addr %s220, 8
      %s222 = scalar_lea.vmem %s0, %s221
      %p223 = pneg %p38
      %p224 = pneg %p35
      %p225 = pneg %p59
      %p226 = pneg %p56
      %p227 = pneg %p80
      %p228 = pneg %p77
      %p229 = pneg %p101
      %p230 = pneg %p98
      %p231 = pneg %p122
      %p232 = pneg %p119
      %p233 = pneg %p143
      %p234 = pneg %p140
      %p235 = pneg %p169
      %p236 = pneg %p166
      %p237 = scmp.lt.s32.totalorder %s17, 1
      %s238 = scalar_select %p237, %s17, 1
      %s239 = smul.addr %s238, 2
      %s240 = smul.addr %s239, 8
      %s241 = scalar_lea.vmem %s6, %s240
      %p242 = scmp.lt.s32.totalorder %s17, 1
      %s243 = scalar_select %p242, %s17, 1
      %s244 = smul.addr %s243, 2
      %s245 = smul.addr %s244, 8
      %s246 = scalar_lea.vmem %s0, %s245
      %p247 = scmp.lt.s32.totalorder %s17, 1
      %s248 = scalar_select %p247, %s17, 1
      %s249 = smul.addr %s248, 2
      %s250 = smul.addr %s249, 8
      %s251 = scalar_lea.vmem %s6, %s250
      %v252 = vld [vmem:[%s246] sm:$0xff]
      %v253 = vld [vmem:[%s246 + $0x8] sm:$0xff]
      %vm254 = vcmask 523264
      %v255 = vsel %vm254, %v252, 0.0
      %v256 = vsel %vm254, %v253, 0.0
      %v257 = vadd.f32 %v255, %v256
      %v258 = vrot.slane %v257, 4
      %v259 = vadd.f32 %v257, %v258
      %v260 = vrot.slane %v259, 2
      %v261 = vadd.f32 %v259, %v260
      %v262 = vrot.slane %v261, 1
      %v263 = vadd.f32 %v261, %v262
      %v264 = vld [vmem:[%s2] sm:$0xff]
      %v265 = vld [vmem:[%s2 + $0x8] sm:$0xff]
      %v266 = vld [vmem:[%s2 + $0x10] sm:$0xff]
      %v267 = vld [vmem:[%s2 + $0x18] sm:$0xff]
      %v268 = vld [vmem:[%s2 + $0x20] sm:$0xff]
      %v269 = vld [vmem:[%s2 + $0x28] sm:$0xff]
      %v270 = vld [vmem:[%s2 + $0x30] sm:$0xff]
      %v271 = vld [vmem:[%s2 + $0x38] sm:$0xff]
      %v272 = vld [vmem:[%s1] sm:$0xff]
      %v273 = vld [vmem:[%s1 + $0x8] sm:$0xff]
      %v274 = vld [vmem:[%s1 + $0x10] sm:$0xff]
      %v275 = vld [vmem:[%s1 + $0x18] sm:$0xff]
      %v276 = vld [vmem:[%s1 + $0x20] sm:$0xff]
      %v277 = vld [vmem:[%s1 + $0x28] sm:$0xff]
      %v278 = vld [vmem:[%s1 + $0x30] sm:$0xff]
      %v279 = vld [vmem:[%s1 + $0x38] sm:$0xff]
      %v280 = vld [vmem:[%s3] sm:$0x1]
      %v282 = vsel %vm254, %v263, 0
      %284 = vmatprep.subr.mxu0 0.0
      %285 = vmatpush1.msra.mxu0 %v264
      %286 = vmatprep.subr.mxu0 0.0
      %287 = vmatpush1.msra.mxu0 %v265
      %288 = vmatprep.subr.mxu0 0.0
      %289 = vmatpush1.msra.mxu0 %v266
      %290 = vmatprep.subr.mxu0 0.0
      %291 = vmatpush1.msra.mxu0 %v267
      %292 = vmatprep.subr.mxu0 0.0
      %293 = vmatpush1.msra.mxu0 %v268
      %294 = vmatprep.subr.mxu0 0.0
      %295 = vmatpush1.msra.mxu0 %v269
      %296 = vmatprep.subr.mxu0 0.0
      %297 = vmatpush1.msra.mxu0 %v270
      %298 = vmatprep.subr.mxu0 0.0
      %299 = vmatpush1.msra.mxu0 %v271
      %300 = vmatprep.subr.mxu0 0.0
      %301 = vmatpush1.msra.mxu0 0.0
      %302 = vmatprep.subr.mxu0 0.0
      %303 = vmatpush1.msra.mxu0 0.0
      %304 = vmatprep.subr.mxu0 0.0
      %305 = vmatpush1.msra.mxu0 0.0
      %306 = vmatprep.subr.mxu0 0.0
      %307 = vmatpush1.msra.mxu0 0.0
      %308 = vmatprep.subr.mxu0 0.0
      %309 = vmatpush1.msra.mxu0 0.0
      %310 = vmatprep.subr.mxu0 0.0
      %311 = vmatpush1.msra.mxu0 0.0
      %312 = vmatprep.subr.mxu0 0.0
      %313 = vmatpush1.msra.mxu0 0.0
      %314 = vmatprep.subr.mxu0 0.0
      %315 = vmatpush1.msra.mxu0 0.0
      %316 = vmatprep.subr.mxu0 0.0
      %317 = vmatpush1.msra.mxu0 0.0
      %318 = vmatprep.subr.mxu0 0.0
      %319 = vmatpush1.msra.mxu0 0.0
      %320 = vmatprep.subr.mxu0 0.0
      %321 = vmatpush1.msra.mxu0 0.0
      %322 = vmatprep.subr.mxu0 0.0
      %323 = vmatpush1.msra.mxu0 0.0
      %324 = vmatprep.subr.mxu0 0.0
      %325 = vmatpush1.msra.mxu0 0.0
      %326 = vmatprep.subr.mxu0 0.0
      %327 = vmatpush1.msra.mxu0 0.0
      %328 = vmatprep.subr.mxu0 0.0
      %329 = vmatpush1.msra.mxu0 0.0
      %330 = vmatprep.subr.mxu0 0.0
      %331 = vmatpush1.msra.mxu0 0.0
      %332 = vmatprep.subr.mxu0 0.0
      %333 = vmatpush1.msra.mxu0 0.0
      %334 = vmatprep.subr.mxu0 0.0
      %335 = vmatpush1.msra.mxu0 0.0
      %336 = vmatprep.subr.mxu0 0.0
      %337 = vmatpush1.msra.mxu0 0.0
      %338 = vmatprep.subr.mxu0 0.0
      %339 = vmatpush1.msra.mxu0 0.0
      %340 = vmatprep.subr.mxu0 0.0
      %341 = vmatpush1.msra.mxu0 0.0
      %342 = vmatprep.subr.mxu0 0.0
      %343 = vmatpush1.msra.mxu0 0.0
      %344 = vmatprep.subr.mxu0 0.0
      %345 = vmatpush1.msra.mxu0 0.0
      %346 = vmatprep.subr.mxu0 0.0
      %347 = vmatpush1.msra.mxu0 0.0
      %348 = vmatprep.mubr.f32.mxu0 0.0
      %349 = vmatmul.mubr.f32.gmra.mrb[0].mxu0 %v282
      %v350 = vpop.f32.mrb[0].mxu0
      %v351 = vadd.f32 %v280, %v350
      %v352 = vpop.f32.mrb[0].mxu0
      %353 = vdwg.mxu0
      %v354 = vlaneseq
      %v355 = vshrl.u32 %v354, 7
      %v356 = vsub.s32 0, %v355
      %v357 = vrot.slane %v351, %v356
      %v359 = vsel %vm254, %v252, 0
      %v362 = vsel %vm254, %v253, 0
      %364 = vmatprep.subr.mxu0 0.0
      %365 = vmatpush1.msra.mxu0 %v272
      %366 = vmatprep.subr.mxu0 0.0
      %367 = vmatpush1.msra.mxu0 %v273
      %368 = vmatprep.subr.mxu0 0.0
      %369 = vmatpush1.msra.mxu0 %v274
      %370 = vmatprep.subr.mxu0 0.0
      %371 = vmatpush1.msra.mxu0 %v275
      %372 = vmatprep.subr.mxu0 0.0
      %373 = vmatpush1.msra.mxu0 %v276
      %374 = vmatprep.subr.mxu0 0.0
      %375 = vmatpush1.msra.mxu0 %v277
      %376 = vmatprep.subr.mxu0 0.0
      %377 = vmatpush1.msra.mxu0 %v278
      %378 = vmatprep.subr.mxu0 0.0
      %379 = vmatpush1.msra.mxu0 %v279
      %380 = vmatprep.subr.mxu0 0.0
      %381 = vmatpush1.msra.mxu0 0.0
      %382 = vmatprep.subr.mxu0 0.0
      %383 = vmatpush1.msra.mxu0 0.0
      %384 = vmatprep.subr.mxu0 0.0
      %385 = vmatpush1.msra.mxu0 0.0
      %386 = vmatprep.subr.mxu0 0.0
      %387 = vmatpush1.msra.mxu0 0.0
      %388 = vmatprep.subr.mxu0 0.0
      %389 = vmatpush1.msra.mxu0 0.0
      %390 = vmatprep.subr.mxu0 0.0
      %391 = vmatpush1.msra.mxu0 0.0
      %392 = vmatprep.subr.mxu0 0.0
      %393 = vmatpush1.msra.mxu0 0.0
      %394 = vmatprep.subr.mxu0 0.0
      %395 = vmatpush1.msra.mxu0 0.0
      %396 = vmatprep.subr.mxu0 0.0
      %397 = vmatpush1.msra.mxu0 0.0
      %398 = vmatprep.subr.mxu0 0.0
      %399 = vmatpush1.msra.mxu0 0.0
      %400 = vmatprep.subr.mxu0 0.0
      %401 = vmatpush1.msra.mxu0 0.0
      %402 = vmatprep.subr.mxu0 0.0
      %403 = vmatpush1.msra.mxu0 0.0
      %404 = vmatprep.subr.mxu0 0.0
      %405 = vmatpush1.msra.mxu0 0.0
      %406 = vmatprep.subr.mxu0 0.0
      %407 = vmatpush1.msra.mxu0 0.0
      %408 = vmatprep.subr.mxu0 0.0
      %409 = vmatpush1.msra.mxu0 0.0
      %410 = vmatprep.subr.mxu0 0.0
      %411 = vmatpush1.msra.mxu0 0.0
      %412 = vmatprep.subr.mxu0 0.0
      %413 = vmatpush1.msra.mxu0 0.0
      %414 = vmatprep.subr.mxu0 0.0
      %415 = vmatpush1.msra.mxu0 0.0
      %416 = vmatprep.subr.mxu0 0.0
      %417 = vmatpush1.msra.mxu0 0.0
      %418 = vmatprep.subr.mxu0 0.0
      %419 = vmatpush1.msra.mxu0 0.0
      %420 = vmatprep.subr.mxu0 0.0
      %421 = vmatpush1.msra.mxu0 0.0
      %422 = vmatprep.subr.mxu0 0.0
      %423 = vmatpush1.msra.mxu0 0.0
      %424 = vmatprep.subr.mxu0 0.0
      %425 = vmatpush1.msra.mxu0 0.0
      %426 = vmatprep.subr.mxu0 0.0
      %427 = vmatpush1.msra.mxu0 0.0
      %428 = vmatprep.mubr.f32.mxu0 0.0
      %429 = vmatmul.mubr.f32.gmra.mrb[0].mxu0 %v359
      %v430 = vpop.f32.mrb[0].mxu0
      %v431 = vadd.f32 %v357, %v430
      %v432 = vpop.f32.mrb[0].mxu0
      %433 = vmatprep.mubr.f32.mxu0 0.0
      %434 = vmatmul.mubr.f32.gmra.mrb[0].mxu0 %v362
      %v435 = vpop.f32.mrb[0].mxu0
      %v436 = vadd.f32 %v357, %v435
      %v437 = vpop.f32.mrb[0].mxu0
      %438 = vdwg.mxu0
      %v439 = vmax.f32 %v431, 0.0
      %v440 = vmax.f32 %v436, 0.0
      %v441 = vld [vmem:[%s4] sm:$0xff]
      %v442 = vld [vmem:[%s4 + $0x8] sm:$0xff]
      %v443 = vld [vmem:[%s4 + $0x10] sm:$0xff]
      %v444 = vld [vmem:[%s4 + $0x18] sm:$0xff]
      %v445 = vld [vmem:[%s4 + $0x20] sm:$0xff]
      %v446 = vld [vmem:[%s4 + $0x28] sm:$0xff]
      %v447 = vld [vmem:[%s4 + $0x30] sm:$0xff]
      %v448 = vld [vmem:[%s4 + $0x38] sm:$0xff]
      %v449 = vld [vmem:[%s4 + $0x40] sm:$0xff]
      %v450 = vld [vmem:[%s4 + $0x48] sm:$0xff]
      %v451 = vld [vmem:[%s4 + $0x50] sm:$0xff]
      %v452 = vld [vmem:[%s4 + $0x58] sm:$0xff]
      %v453 = vld [vmem:[%s4 + $0x60] sm:$0xff]
      %v454 = vld [vmem:[%s4 + $0x68] sm:$0xff]
      %v455 = vld [vmem:[%s4 + $0x70] sm:$0xff]
      %v456 = vld [vmem:[%s4 + $0x78] sm:$0xff]
      %v457 = vld [vmem:[%s5] sm:$0x1]
      %v459 = vlaneseq
      %v460 = vshrl.u32 %v459, 7
      %v461 = vsub.s32 0, %v460
      %v462 = vrot.slane %v457, %v461
      %464 = vmatprep.subr.mxu0 0.0
      %465 = vmatpush1.msra.mxu0 %v441
      %466 = vmatprep.subr.mxu0 0.0
      %467 = vmatpush1.msra.mxu0 %v442
      %468 = vmatprep.subr.mxu0 0.0
      %469 = vmatpush1.msra.mxu0 %v443
      %470 = vmatprep.subr.mxu0 0.0
      %471 = vmatpush1.msra.mxu0 %v444
      %472 = vmatprep.subr.mxu0 0.0
      %473 = vmatpush1.msra.mxu0 %v445
      %474 = vmatprep.subr.mxu0 0.0
      %475 = vmatpush1.msra.mxu0 %v446
      %476 = vmatprep.subr.mxu0 0.0
      %477 = vmatpush1.msra.mxu0 %v447
      %478 = vmatprep.subr.mxu0 0.0
      %479 = vmatpush1.msra.mxu0 %v448
      %480 = vmatprep.subr.mxu0 0.0
      %481 = vmatpush1.msra.mxu0 %v449
      %482 = vmatprep.subr.mxu0 0.0
      %483 = vmatpush1.msra.mxu0 %v450
      %484 = vmatprep.subr.mxu0 0.0
      %485 = vmatpush1.msra.mxu0 %v451
      %486 = vmatprep.subr.mxu0 0.0
      %487 = vmatpush1.msra.mxu0 %v452
      %488 = vmatprep.subr.mxu0 0.0
      %489 = vmatpush1.msra.mxu0 %v453
      %490 = vmatprep.subr.mxu0 0.0
      %491 = vmatpush1.msra.mxu0 %v454
      %492 = vmatprep.subr.mxu0 0.0
      %493 = vmatpush1.msra.mxu0 %v455
      %494 = vmatprep.subr.mxu0 0.0
      %495 = vmatpush1.msra.mxu0 %v456
      %496 = vmatprep.subr.mxu0 0.0
      %497 = vmatpush1.msra.mxu0 0.0
      %498 = vmatprep.subr.mxu0 0.0
      %499 = vmatpush1.msra.mxu0 0.0
      %500 = vmatprep.subr.mxu0 0.0
      %501 = vmatpush1.msra.mxu0 0.0
      %502 = vmatprep.subr.mxu0 0.0
      %503 = vmatpush1.msra.mxu0 0.0
      %504 = vmatprep.subr.mxu0 0.0
      %505 = vmatpush1.msra.mxu0 0.0
      %506 = vmatprep.subr.mxu0 0.0
      %507 = vmatpush1.msra.mxu0 0.0
      %508 = vmatprep.subr.mxu0 0.0
      %509 = vmatpush1.msra.mxu0 0.0
      %510 = vmatprep.subr.mxu0 0.0
      %511 = vmatpush1.msra.mxu0 0.0
      %512 = vmatprep.subr.mxu0 0.0
      %513 = vmatpush1.msra.mxu0 0.0
      %514 = vmatprep.subr.mxu0 0.0
      %515 = vmatpush1.msra.mxu0 0.0
      %516 = vmatprep.subr.mxu0 0.0
      %517 = vmatpush1.msra.mxu0 0.0
      %518 = vmatprep.subr.mxu0 0.0
      %519 = vmatpush1.msra.mxu0 0.0
      %520 = vmatprep.subr.mxu0 0.0
      %521 = vmatpush1.msra.mxu0 0.0
      %522 = vmatprep.subr.mxu0 0.0
      %523 = vmatpush1.msra.mxu0 0.0
      %524 = vmatprep.subr.mxu0 0.0
      %525 = vmatpush1.msra.mxu0 0.0
      %526 = vmatprep.subr.mxu0 0.0
      %527 = vmatpush1.msra.mxu0 0.0
      %528 = vmatprep.mubr.f32.mxu0 0.0
      %529 = vmatmul.mubr.f32.gmra.mrb[0].mxu0 %v439
      %v530 = vpop.f32.mrb[0].mxu0
      %v531 = vadd.f32 %v462, %v530
      %v532 = vpop.f32.mrb[0].mxu0
      %533 = vmatprep.mubr.f32.mxu0 0.0
      %534 = vmatmul.mubr.f32.gmra.mrb[0].mxu0 %v440
      %v535 = vpop.f32.mrb[0].mxu0
      %v536 = vadd.f32 %v462, %v535
      %v537 = vpop.f32.mrb[0].mxu0
      %538 = vdwg.mxu0
      %v539 = vmax.f32 %v531, 0.0
      %v540 = vmax.f32 %v536, 0.0
      %541 = vst [vmem:[%s251] sm:$0xff] %v539
      %542 = vst [vmem:[%s251 + $0x8] sm:$0xff] %v540
      %p543 = scmp.lt.s32.totalorder %s17, 1
      %s544 = scalar_select %p543, %s17, 1
      %s545 = smul.addr %s544, 2
      %s546 = smul.addr %s545, 8
      %s547 = scalar_lea.vmem %s6, %s546
      // Predicated region
      $region45: #{globalization_forward.1} parent=43 // pred_check
        %p548 = pneg %p166
      $region46: #{globalization_forward.1} parent=43 // pred_check_branch
        %550 = sbr.rel (%p548) target = $region48
      $region47: #{globalization_forward.1} parent=43 // pred_region
        _
      $region48: #{globalization_forward.1} parent=43 // pred_fallthru
        _
    $region44: #{globalization_forward.1} parent=5 // pred_fallthru
      _
    %p551 = scmp.le.s32.totalorder 2, %s12
    // Predicated region
    $region49: #{globalization_forward.1} parent=5 // pred_check
      %p552 = pneg %p551
    $region50: #{globalization_forward.1} parent=5 // pred_check_branch
      %554 = sbr.rel (%p552) target = $region52
    $region51: #{globalization_forward.1} parent=5 // pred_region
      %s555 = ssub.s32 %s12, 2
      // Predicated region
      $region53: #{globalization_forward.1} parent=51 // pred_check
        %p556 = pneg %p172
      $region54: #{globalization_forward.1} parent=51 // pred_check_branch
        %558 = sbr.rel (%p556) target = $region56
      $region55: #{globalization_forward.1} parent=51 // pred_region
        %p559 = scmp.lt.s32.totalorder %s18, 1
        %s560 = scalar_select %p559, %s18, 1
        %s561 = smul.addr %s560, 2
        %s562 = smul.addr %s561, 8
        %s563 = scalar_lea.vmem %s6, %s562
      $region56: #{globalization_forward.1} parent=51 // pred_fallthru
        _
    $region52: #{globalization_forward.1} parent=5 // pred_fallthru
      _
  $region6: #{globalization_forward.1} parent=0 // loop_footer
    %s16 = sadd.s32 1, %s12
  $region7: #{globalization_forward.1} parent=0 // loop_footer_branch
    %11 = sbr.rel target = $region3
  $region8: #{globalization_forward.1} parent=0 // loop_exit
    _

</llo_original>
